<compile_context>
chip_gen: v7x
topology: tpu7x:2x2x1
jax: 0.10.0
libtpu: 0.0.40
codegen_flags: <defaults>
</compile_context>

<pallas_src>
import functools

import jax
import jax.numpy as jnp
from jax.experimental import pallas as pl
from jax.experimental.pallas import tpu as pltpu


def _round_up(x, m):
    return (x + m - 1) // m * m


def _sublane(dtype):
    # Packed-sublane multiple per element width: f32 -> 8, bf16 -> 16, int8/fp8 -> 32.
    return {4: 8, 2: 16, 1: 32}.get(jnp.dtype(dtype).itemsize, 8)


def _vmem_budget_bytes():
    # Generation-aware cap (leave headroom for Mosaic internal scratch):
    # ~48 MiB on v7x (64 MiB/TC), ~96 MiB on v5e/v6e (128 MiB).
    try:
        cap = int(pltpu.get_tpu_info().vmem_capacity_bytes)
    except Exception:  # pragma: no cover - conservative fallback
        cap = 64 * 2**20
    return max(16 * 2**20, (cap * 3) // 4)


def _pick_tile(dim_p, max_t):
    """Largest multiple of 128 that divides dim_p and is <= max_t (both mult. of 128)."""
    t = min(max_t, dim_p)
    while dim_p % t:
        t -= 128
    return t


# ---------------------------------------------------------------------------
# Fused whole-encoder kernel: every Linear+Sigmoid layer in one grid step,
# intermediate activations stay in VMEM/vregs.
# ---------------------------------------------------------------------------
def _fused_encoder_kernel(*refs, num_layers):
    # refs = (x_ref, w0, b0, w1, b1, ..., w_{L-1}, b_{L-1}, o_ref)
    x_ref = refs[0]
    o_ref = refs[-1]
    y = x_ref[...]
    for l in range(num_layers):
        w_ref = refs[1 + 2 * l]
        b_ref = refs[2 + 2 * l]
        z = jnp.dot(y.astype(w_ref.dtype), w_ref[...],
                    preferred_element_type=jnp.float32)
        z = z + b_ref[...].astype(jnp.float32)
        y = jax.nn.sigmoid(z)            # f32; recast to compute dtype next iter
    o_ref[...] = y.astype(o_ref.dtype)


def _fused_encoder_call(xp, weights_p, biases_p, *, tm, out_dtype,
                        vmem_budget, needed_bytes, true_dims):
    Mp, K0p = xp.shape
    NLp = weights_p[-1].shape[1]
    L = len(weights_p)

    in_specs = [pl.BlockSpec((tm, K0p), lambda i: (i, 0))]
    operands = [xp]
    for w, b in zip(weights_p, biases_p):
        Kp, Np = w.shape
        in_specs.append(pl.BlockSpec((Kp, Np), lambda i: (0, 0)))   # resident weight
        in_specs.append(pl.BlockSpec((1, Np), lambda i: (0, 0)))    # resident bias
        operands.extend([w, b])

    cbytes = jnp.dtype(xp.dtype).itemsize
    flops = sum(2 * Mp * din * dout for din, dout in true_dims)
    trans = sum(Mp * dout for _, dout in true_dims)
    bytes_acc = (Mp * true_dims[0][0] * cbytes
                 + sum(din * dout * cbytes + dout * 4 for din, dout in true_dims)
                 + Mp * true_dims[-1][1] * jnp.dtype(out_dtype).itemsize)
    vmem_limit = int(min(vmem_budget, max(32 * 2**20, 2 * needed_bytes)))

    return pl.pallas_call(
        functools.partial(_fused_encoder_kernel, num_layers=L),
        out_shape=jax.ShapeDtypeStruct((Mp, NLp), out_dtype),
        grid_spec=pltpu.PrefetchScalarGridSpec(
            num_scalar_prefetch=0,
            grid=(Mp // tm,),
            in_specs=in_specs,
            out_specs=pl.BlockSpec((tm, NLp), lambda i: (i, 0)),
        ),
        compiler_params=pltpu.CompilerParams(
            dimension_semantics=("parallel",),
            vmem_limit_bytes=vmem_limit,
        ),
        cost_estimate=pl.CostEstimate(flops=flops, transcendentals=trans,
                                      bytes_accessed=bytes_acc),
    )(*operands)


# ---------------------------------------------------------------------------
# Per-layer fallback: tiled matmul with f32 accumulator, fused bias + sigmoid.
# Used when the full weight stack does not fit in VMEM.
# ---------------------------------------------------------------------------
def _linear_sigmoid_kernel(x_ref, w_ref, b_ref, o_ref, acc_ref):
    @pl.when(pl.program_id(2) == 0)
    def _init():
        acc_ref[...] = jnp.zeros_like(acc_ref)

    acc_ref[...] += jnp.dot(x_ref[...], w_ref[...],
                            preferred_element_type=jnp.float32)

    @pl.when(pl.program_id(2) == pl.num_programs(2) - 1)
    def _finalize():
        z = acc_ref[...] + b_ref[...].astype(jnp.float32)
        o_ref[...] = jax.nn.sigmoid(z).astype(o_ref.dtype)


def _linear_sigmoid_padded(xp, wp, bp, *, tm, vmem_budget,
                           tn_max=512, tk_max=1024):
    """sigmoid(xp @ wp + bp) on pre-padded operands; output stays padded."""
    Mp, Kp = xp.shape
    _, Np = wp.shape
    tn = _pick_tile(Np, tn_max)   # prefer covering the whole layer width (lane-dense)
    tk = _pick_tile(Kp, tk_max)

    cbytes = jnp.dtype(xp.dtype).itemsize
    needed = 2 * (tm * tk * cbytes + tk * tn * cbytes + tn * 4
                  + tm * tn * cbytes) + tm * tn * 4
    vmem_limit = int(min(vmem_budget, max(32 * 2**20, 2 * needed)))

    return pl.pallas_call(
        _linear_sigmoid_kernel,
        out_shape=jax.ShapeDtypeStruct((Mp, Np), xp.dtype),
        grid_spec=pltpu.PrefetchScalarGridSpec(
            num_scalar_prefetch=0,
            grid=(Mp // tm, Np // tn, Kp // tk),
            in_specs=[
                pl.BlockSpec((tm, tk), lambda i, j, k: (i, k)),
                pl.BlockSpec((tk, tn), lambda i, j, k: (k, j)),
                pl.BlockSpec((1, tn), lambda i, j, k: (0, j)),
            ],
            out_specs=pl.BlockSpec((tm, tn), lambda i, j, k: (i, j)),
            scratch_shapes=[pltpu.VMEM((tm, tn), jnp.float32)],
        ),
        compiler_params=pltpu.CompilerParams(
            dimension_semantics=("parallel", "parallel", "arbitrary"),
            vmem_limit_bytes=vmem_limit,
        ),
    )(xp, wp, bp)


# ---------------------------------------------------------------------------
# Module wrapper mirroring the PyTorch Encoder.
# ---------------------------------------------------------------------------
class EncoderPallas:
    """Stack of (Linear + Sigmoid) layers, fused into one Pallas call when possible."""

    def __init__(self, input_feature_size, hidden_layer_sizes, key,
                 compute_dtype=jnp.float32, tm_max=256):
        self.num_layers = len(hidden_layer_sizes)
        self.output_feature_size = (hidden_layer_sizes[-1]
                                    if hidden_layer_sizes else input_feature_size)
        self.compute_dtype = compute_dtype
        self.tm_max = tm_max

        self.weights_kn = []   # unpadded (in, out), f32 (reference / get_layer_weights)
        self.biases = []       # unpadded (out,), f32
        weights_p, biases_p, true_dims = [], [], []
        prev = input_feature_size
        for curr in hidden_layer_sizes:
            key, kw, kb = jax.random.split(key, 3)
            bound = 1.0 / (prev ** 0.5)
            # nn.Linear-style uniform(-1/sqrt(in), 1/sqrt(in)) init, torch (out, in)...
            w_torch = jax.random.uniform(kw, (curr, prev), jnp.float32, -bound, bound)
            b = jax.random.uniform(kb, (curr,), jnp.float32, -bound, bound)
            w_kn = jnp.asarray(w_torch).T                       # (in, out)
            self.weights_kn.append(w_kn)
            self.biases.append(b)
            # ...padded ONCE to lane-aligned (Kp, Np) in the compute dtype.
            Kp, Np = _round_up(prev, 128), _round_up(curr, 128)
            w_p = jnp.zeros((Kp, Np), compute_dtype).at[:prev, :curr].set(
                w_kn.astype(compute_dtype))
            b_p = jnp.zeros((1, Np), jnp.float32).at[0, :curr].set(b)
            weights_p.append(w_p)
            biases_p.append(b_p)
            true_dims.append((prev, curr))
            prev = curr

        self.weights_p = tuple(weights_p)
        self.biases_p = tuple(biases_p)
        self._true_dims = tuple(true_dims)
        self._jit_forward = jax.jit(self._forward_impl)

    # --- forward ----------------------------------------------------------
    def __call__(self, x):
        if self.num_layers == 0:
            return x
        return self._jit_forward(x, self.weights_p, self.biases_p)

    def _fused_vmem_bytes(self, tm, out_dtype):
        cbytes = jnp.dtype(self.compute_dtype).itemsize
        obytes = jnp.dtype(out_dtype).itemsize
        w_bytes = sum(int(w.size) * w.dtype.itemsize for w in self.weights_p)
        b_bytes = sum(int(b.size) * b.dtype.itemsize for b in self.biases_p)
        x_tile = tm * self.weights_p[0].shape[0] * cbytes
        o_tile = tm * self.weights_p[-1].shape[1] * obytes
        inter = sum(tm * w.shape[1] * 4 for w in self.weights_p)   # f32 intermediates
        # inputs/outputs double-buffered by the pipeline even when resident.
        return 2 * (x_tile + o_tile + w_bytes + b_bytes) + 2 * inter

    def _forward_impl(self, x, weights_p, biases_p):
        out_dtype = x.dtype
        M, K = x.shape
        sub = max(8, _sublane(self.compute_dtype))
        tm = min(self.tm_max, _round_up(M, sub))
        Mp = _round_up(M, tm)
        K0p = weights_p[0].shape[0]
        budget = _vmem_budget_bytes()

        xp = x.astype(self.compute_dtype)
        if (Mp, K0p) != (M, K):
            xp = jnp.pad(xp, ((0, Mp - M), (0, K0p - K)))

        needed = self._fused_vmem_bytes(tm, out_dtype)
        if needed <= budget:
            out_p = _fused_encoder_call(
                xp, weights_p, biases_p, tm=tm, out_dtype=out_dtype,
                vmem_budget=budget, needed_bytes=needed, true_dims=self._true_dims)
        else:
            # Weight stack too big for VMEM: per-layer tiled kernels, activations
            # kept padded (zero-padded weight K rows cancel padded columns).
            y = xp
            for w, b in zip(weights_p, biases_p):
                y = _linear_sigmoid_padded(y, w, b, tm=tm, vmem_budget=budget)
            out_p = y.astype(out_dtype)

        return out_p[:M, :self.output_feature_size]

    # --- PyTorch-compatible accessor ---------------------------------------
    def get_layer_weights(self, layer_idx):
        if layer_idx not in range(self.num_layers):
            raise ValueError('Invalid layer index')
        return self.weights_kn[layer_idx].T   # back to PyTorch (out, in) layout


def _reference_forward(x, weights_kn, biases):
    y = x
    for w, b in zip(weights_kn, biases):
        y = jax.nn.sigmoid(y @ w + b)
    return y


if __name__ == "__main__":
    key = jax.random.PRNGKey(0)
    k_x, k_x2, k_mod = jax.random.split(key, 3)

    batch, input_feature_size = 8, 32
    hidden_layer_sizes = [64, 16]

    enc = EncoderPallas(input_feature_size, hidden_layer_sizes, k_mod)

    # Case 1: small aligned-ish batch through the fused single-call path.
    x = jax.random.normal(k_x, (batch, input_feature_size), jnp.float32)
    y = enc(x)
    jax.block_until_ready(y)
    y_ref = _reference_forward(x, enc.weights_kn, enc.biases)
    assert y.shape == (batch, hidden_layer_sizes[-1])
    assert jnp.allclose(y, y_ref, atol=1e-5, rtol=1e-5), "encoder mismatch (batch=8)"

    # Case 2: batch not divisible by the tile -> exercises the padding path.
    x2 = jax.random.normal(k_x2, (5, input_feature_size), jnp.float32)
    y2 = enc(x2)
    jax.block_until_ready(y2)
    y2_ref = _reference_forward(x2, enc.weights_kn, enc.biases)
    assert y2.shape == (5, hidden_layer_sizes[-1])
    assert jnp.allclose(y2, y2_ref, atol=1e-5, rtol=1e-5), "encoder mismatch (batch=5)"

    # Case 3: bf16 operands (f32 accumulate + f32 sigmoid inside), tm rounds to 16.
    enc_bf16 = EncoderPallas(input_feature_size, hidden_layer_sizes, k_mod,
                             compute_dtype=jnp.bfloat16)
    y3 = enc_bf16(x)
    jax.block_until_ready(y3)
    assert y3.dtype == x.dtype
    assert jnp.allclose(y3, y_ref, atol=5e-2, rtol=5e-2), "encoder mismatch (bf16)"

    print("KERNEL_OK")
</pallas_src>

<mosaic_0001>
module attributes {stable_mosaic.version = 11 : i64} {
  func.func @_fused_encoder_kernel(%arg0: i32, %arg1: memref<8x128xf32, #tpu.memory_space<vmem>>, %arg2: memref<128x128xf32, #tpu.memory_space<vmem>>, %arg3: memref<1x128xf32, #tpu.memory_space<vmem>>, %arg4: memref<128x128xf32, #tpu.memory_space<vmem>>, %arg5: memref<1x128xf32, #tpu.memory_space<vmem>>, %arg6: memref<8x128xf32, #tpu.memory_space<vmem>>) attributes {dimension_semantics = [#tpu.dimension_semantics<parallel>], iteration_bounds = array<i64: 1>, scalar_prefetch = 0 : i64, scratch_operands = 0 : i64, tpu.core_type = #tpu.core_type<tc>, window_params = [{transform_indices = @transform_0, window_bounds = array<i64: 8, 128>}, {pipeline_mode = #tpu.pipeline_mode<synchronous>, transform_indices = @transform_1, window_bounds = array<i64: 128, 128>}, {pipeline_mode = #tpu.pipeline_mode<synchronous>, transform_indices = @transform_2, window_bounds = array<i64: 1, 128>}, {pipeline_mode = #tpu.pipeline_mode<synchronous>, transform_indices = @transform_3, window_bounds = array<i64: 128, 128>}, {pipeline_mode = #tpu.pipeline_mode<synchronous>, transform_indices = @transform_4, window_bounds = array<i64: 1, 128>}, {transform_indices = @transform_5, window_bounds = array<i64: 8, 128>}]} {
    %c0 = arith.constant 0 : index
    %c0_0 = arith.constant 0 : index
    %0 = vector.load %arg1[%c0, %c0_0] : memref<8x128xf32, #tpu.memory_space<vmem>>, vector<8x128xf32>
    %c0_1 = arith.constant 0 : index
    %c0_2 = arith.constant 0 : index
    %1 = vector.load %arg2[%c0_1, %c0_2] : memref<128x128xf32, #tpu.memory_space<vmem>>, vector<128x128xf32>
    %cst = arith.constant dense<0.000000e+00> : vector<8x128xf32>
    %2 = tpu.matmul %0, %1, %cst {dimension_numbers = #tpu.dot_dimension_numbers<[1], [0], [0], [1], [0, 0, 1, 1], [], []>} : vector<8x128xf32>, vector<128x128xf32>, vector<8x128xf32> -> vector<8x128xf32>
    %c0_3 = arith.constant 0 : index
    %c0_4 = arith.constant 0 : index
    %3 = vector.load %arg3[%c0_3, %c0_4] : memref<1x128xf32, #tpu.memory_space<vmem>>, vector<1x128xf32>
    %4 = vector.broadcast %3 : vector<1x128xf32> to vector<8x128xf32>
    %5 = arith.addf %2, %4 : vector<8x128xf32>
    %6 = arith.negf %5 : vector<8x128xf32>
    %7 = math.exp %6 : vector<8x128xf32>
    %cst_5 = arith.constant 1.000000e+00 : f32
    %8 = vector.broadcast %cst_5 : f32 to vector<8x128xf32>
    %9 = arith.addf %8, %7 : vector<8x128xf32>
    %10 = arith.divf %8, %9 : vector<8x128xf32>
    %c0_6 = arith.constant 0 : index
    %c0_7 = arith.constant 0 : index
    %11 = vector.load %arg4[%c0_6, %c0_7] : memref<128x128xf32, #tpu.memory_space<vmem>>, vector<128x128xf32>
    %cst_8 = arith.constant dense<0.000000e+00> : vector<8x128xf32>
    %12 = tpu.matmul %10, %11, %cst_8 {dimension_numbers = #tpu.dot_dimension_numbers<[1], [0], [0], [1], [0, 0, 1, 1], [], []>} : vector<8x128xf32>, vector<128x128xf32>, vector<8x128xf32> -> vector<8x128xf32>
    %c0_9 = arith.constant 0 : index
    %c0_10 = arith.constant 0 : index
    %13 = vector.load %arg5[%c0_9, %c0_10] : memref<1x128xf32, #tpu.memory_space<vmem>>, vector<1x128xf32>
    %14 = vector.broadcast %13 : vector<1x128xf32> to vector<8x128xf32>
    %15 = arith.addf %12, %14 : vector<8x128xf32>
    %16 = arith.negf %15 : vector<8x128xf32>
    %17 = math.exp %16 : vector<8x128xf32>
    %cst_11 = arith.constant 1.000000e+00 : f32
    %18 = vector.broadcast %cst_11 : f32 to vector<8x128xf32>
    %19 = arith.addf %18, %17 : vector<8x128xf32>
    %20 = arith.divf %18, %19 : vector<8x128xf32>
    %c0_12 = arith.constant 0 : index
    %c0_13 = arith.constant 0 : index
    %21 = vector.load %arg6[%c0_12, %c0_13] : memref<8x128xf32, #tpu.memory_space<vmem>>, vector<8x128xf32>
    tpu.vector_store %arg6[%c0_12, %c0_13], %20 {strides = array<i32>} : memref<8x128xf32, #tpu.memory_space<vmem>>, vector<8x128xf32>,
    return
  }
  func.func @transform_0(%arg0: i32) -> (i32, i32) {
    %c0_i32 = arith.constant 0 : i32
    %c0_i32_0 = arith.constant 0 : i32
    return %arg0, %c0_i32 : i32, i32
  }
  func.func @transform_1(%arg0: i32) -> (i32, i32) {
    %c0_i32 = arith.constant 0 : i32
    %c0_i32_0 = arith.constant 0 : i32
    %c0_i32_1 = arith.constant 0 : i32
    return %c0_i32, %c0_i32_0 : i32, i32
  }
  func.func @transform_2(%arg0: i32) -> (i32, i32) {
    %c0_i32 = arith.constant 0 : i32
    %c0_i32_0 = arith.constant 0 : i32
    %c0_i32_1 = arith.constant 0 : i32
    return %c0_i32, %c0_i32_0 : i32, i32
  }
  func.func @transform_3(%arg0: i32) -> (i32, i32) {
    %c0_i32 = arith.constant 0 : i32
    %c0_i32_0 = arith.constant 0 : i32
    %c0_i32_1 = arith.constant 0 : i32
    return %c0_i32, %c0_i32_0 : i32, i32
  }
  func.func @transform_4(%arg0: i32) -> (i32, i32) {
    %c0_i32 = arith.constant 0 : i32
    %c0_i32_0 = arith.constant 0 : i32
    %c0_i32_1 = arith.constant 0 : i32
    return %c0_i32, %c0_i32_0 : i32, i32
  }
  func.func @transform_5(%arg0: i32) -> (i32, i32) {
    %c0_i32 = arith.constant 0 : i32
    %c0_i32_0 = arith.constant 0 : i32
    return %arg0, %c0_i32 : i32, i32
  }
}

</mosaic_0001>

<llo_original>
// kernel: _forward_impl.1
$region0: #{_forward_impl.1}
  #allocation0 [shape = 'u32[]', space=smem, size = 0x4, offset = 0x4, fixed_abs, tag = 'smem constant byte address 0x4 - core index']
  #allocation1 [shape = 'u32[144,128]{1,0:T(1,128)}', space=vmem, size = 0x12000, scoped, tag = 'internal scratch']
  %s0 = inlined_call_operand.vmem [shape: f32[8,128], index: 0, kind: input, shape index: {}]
  %s1 = inlined_call_operand.hbm [shape: f32[128,128], index: 1, kind: input, shape index: {}]
  %s2 = inlined_call_operand.vmem [shape: f32[1,128], index: 2, kind: input, shape index: {}]
  %s3 = inlined_call_operand.hbm [shape: f32[128,128], index: 3, kind: input, shape index: {}]
  %s4 = inlined_call_operand.vmem [shape: f32[1,128], index: 4, kind: input, shape index: {}]
  %s5 = inlined_call_operand.hbm [shape: f32[8,128], index: 5, kind: output, shape index: {}]
  %s6 = sld [smem:[#allocation0]]
  $region38: #{_forward_impl.1} parent=0
    _
  %s8 = ssub.s32 1, %s6
  %s9 = scalar_select 0, %s8, %s6
  $region1: #{_forward_impl.1} parent=0
    #allocation2 [shape = 'u8[65536]{0}', space=vmem, size = 0x10000, scoped, tag = 'input window, operand 1, single buffered']
    #allocation3 [shape = 's32[1]{0}', space=sflag, size = 0x4, scoped, tag = 'scoped memory for _forward_impl.1']
    #allocation4 [shape = 's32[1]{0}', space=sflag, size = 0x4, scoped, tag = 'scoped memory for _forward_impl.1']
    #allocation5 [shape = 'u8[65536]{0}', space=vmem, size = 0x10000, scoped, tag = 'input window, operand 3, single buffered']
    #allocation6 [shape = 's32[1]{0}', space=sflag, size = 0x4, scoped, tag = 'scoped memory for _forward_impl.1']
    #allocation7 [shape = 'u8[4096]{0}', space=vmem, size = 0x1000, scoped, tag = 'output window, operand 0, single buffered']
    %10 = vsyncpa [#allocation3], 0
    %11 = vsyncpa [#allocation6], 0
    %12 = vsyncpa [#allocation4], 0
    // Predicated region
    $region2: #{_forward_impl.1} parent=1 // pred_check
      _
    $region3: #{_forward_impl.1} parent=1 // pred_check_branch
      %14 = sbr.rel (0) target = $region5
    $region4: #{_forward_impl.1} parent=1 // pred_region
      _
    $region5: #{_forward_impl.1} parent=1 // pred_fallthru
      _
    // Predicated region
    $region6: #{_forward_impl.1} parent=1 // pred_check
      _
    $region7: #{_forward_impl.1} parent=1 // pred_check_branch
      %16 = sbr.rel (0) target = $region9
    $region8: #{_forward_impl.1} parent=1 // pred_region
      %s18 = ssub.s32 2048, 2048
      %19 = vsyncadd [#allocation3], %s18
      %s20 = sshll.u32 [#allocation2], 4
      %s21 = int_to_ptr.vmem [resolvable:$true] %s20
      %26 = dma.hbm_to_vmem [thread:$0]  %s1, 2048, %s21, [#allocation3], 128, 128, 8
    $region9: #{_forward_impl.1} parent=1 // pred_fallthru
      _
    // Predicated region
    $region10: #{_forward_impl.1} parent=1 // pred_check
      _
    $region11: #{_forward_impl.1} parent=1 // pred_check_branch
      %28 = sbr.rel (0) target = $region13
    $region12: #{_forward_impl.1} parent=1 // pred_region
      _
    $region13: #{_forward_impl.1} parent=1 // pred_fallthru
      _
    // Predicated region
    $region14: #{_forward_impl.1} parent=1 // pred_check
      _
    $region15: #{_forward_impl.1} parent=1 // pred_check_branch
      %30 = sbr.rel (0) target = $region17
    $region16: #{_forward_impl.1} parent=1 // pred_region
      %s32 = ssub.s32 2048, 2048
      %33 = vsyncadd [#allocation6], %s32
      %s34 = sshll.u32 [#allocation5], 4
      %s35 = int_to_ptr.vmem [resolvable:$true] %s34
      %40 = dma.hbm_to_vmem [thread:$0]  %s3, 2048, %s35, [#allocation6], 128, 128, 8
    $region17: #{_forward_impl.1} parent=1 // pred_fallthru
      _
    // Predicated region
    $region18: #{_forward_impl.1} parent=1 // pred_check
      _
    $region19: #{_forward_impl.1} parent=1 // pred_check_branch
      %42 = sbr.rel (0) target = $region21
    $region20: #{_forward_impl.1} parent=1 // pred_region
      _
    $region21: #{_forward_impl.1} parent=1 // pred_fallthru
      _
    // Predicated region
    $region22: #{_forward_impl.1} parent=1 // pred_check
      _
    $region23: #{_forward_impl.1} parent=1 // pred_check_branch
      %44 = sbr.rel (0) target = $region25
    $region24: #{_forward_impl.1} parent=1 // pred_region
      %45 = dma.done [#allocation3], 2048
    $region25: #{_forward_impl.1} parent=1 // pred_fallthru
      _
    // Predicated region
    $region26: #{_forward_impl.1} parent=1 // pred_check
      _
    $region27: #{_forward_impl.1} parent=1 // pred_check_branch
      %47 = sbr.rel (0) target = $region29
    $region28: #{_forward_impl.1} parent=1 // pred_region
      %48 = dma.done [#allocation6], 2048
    $region29: #{_forward_impl.1} parent=1 // pred_fallthru
      _
    %v49 = vld [vmem:[%s0] sm:$0xff]
    %v50 = vld [vmem:[#allocation2] sm:$0xff]
    %v51 = vld [vmem:[#allocation2 + $0x8] sm:$0xff]
    %v52 = vld [vmem:[#allocation2 + $0x10] sm:$0xff]
    %v53 = vld [vmem:[#allocation2 + $0x18] sm:$0xff]
    %v54 = vld [vmem:[#allocation2 + $0x20] sm:$0xff]
    %v55 = vld [vmem:[#allocation2 + $0x28] sm:$0xff]
    %v56 = vld [vmem:[#allocation2 + $0x30] sm:$0xff]
    %v57 = vld [vmem:[#allocation2 + $0x38] sm:$0xff]
    %v58 = vld [vmem:[#allocation2 + $0x40] sm:$0xff]
    %v59 = vld [vmem:[#allocation2 + $0x48] sm:$0xff]
    %v60 = vld [vmem:[#allocation2 + $0x50] sm:$0xff]
    %v61 = vld [vmem:[#allocation2 + $0x58] sm:$0xff]
    %v62 = vld [vmem:[#allocation2 + $0x60] sm:$0xff]
    %v63 = vld [vmem:[#allocation2 + $0x68] sm:$0xff]
    %v64 = vld [vmem:[#allocation2 + $0x70] sm:$0xff]
    %v65 = vld [vmem:[#allocation2 + $0x78] sm:$0xff]
    %v66 = vld [vmem:[%s2] sm:$0x1]
    %v68 = vlaneseq
    %v69 = vshrl.u32 %v68, 7
    %v70 = vsub.s32 0, %v69
    %v71 = vrot.slane %v66, %v70
    %73 = vmatprep.subr.mxu0 0.0
    %74 = vmatpush1.msra.mxu0 %v50
    %75 = vmatprep.subr.mxu0 0.0
    %76 = vmatpush1.msra.mxu0 %v51
    %77 = vmatprep.subr.mxu0 0.0
    %78 = vmatpush1.msra.mxu0 %v52
    %79 = vmatprep.subr.mxu0 0.0
    %80 = vmatpush1.msra.mxu0 %v53
    %81 = vmatprep.subr.mxu0 0.0
    %82 = vmatpush1.msra.mxu0 %v54
    %83 = vmatprep.subr.mxu0 0.0
    %84 = vmatpush1.msra.mxu0 %v55
    %85 = vmatprep.subr.mxu0 0.0
    %86 = vmatpush1.msra.mxu0 %v56
    %87 = vmatprep.subr.mxu0 0.0
    %88 = vmatpush1.msra.mxu0 %v57
    %89 = vmatprep.subr.mxu0 0.0
    %90 = vmatpush1.msra.mxu0 %v58
    %91 = vmatprep.subr.mxu0 0.0
    %92 = vmatpush1.msra.mxu0 %v59
    %93 = vmatprep.subr.mxu0 0.0
    %94 = vmatpush1.msra.mxu0 %v60
    %95 = vmatprep.subr.mxu0 0.0
    %96 = vmatpush1.msra.mxu0 %v61
    %97 = vmatprep.subr.mxu0 0.0
    %98 = vmatpush1.msra.mxu0 %v62
    %99 = vmatprep.subr.mxu0 0.0
    %100 = vmatpush1.msra.mxu0 %v63
    %101 = vmatprep.subr.mxu0 0.0
    %102 = vmatpush1.msra.mxu0 %v64
    %103 = vmatprep.subr.mxu0 0.0
    %104 = vmatpush1.msra.mxu0 %v65
    %105 = vmatprep.subr.mxu0 0.0
    %106 = vmatpush1.msra.mxu0 0.0
    %107 = vmatprep.subr.mxu0 0.0
    %108 = vmatpush1.msra.mxu0 0.0
    %109 = vmatprep.subr.mxu0 0.0
    %110 = vmatpush1.msra.mxu0 0.0
    %111 = vmatprep.subr.mxu0 0.0
    %112 = vmatpush1.msra.mxu0 0.0
    %113 = vmatprep.subr.mxu0 0.0
    %114 = vmatpush1.msra.mxu0 0.0
    %115 = vmatprep.subr.mxu0 0.0
    %116 = vmatpush1.msra.mxu0 0.0
    %117 = vmatprep.subr.mxu0 0.0
    %118 = vmatpush1.msra.mxu0 0.0
    %119 = vmatprep.subr.mxu0 0.0
    %120 = vmatpush1.msra.mxu0 0.0
    %121 = vmatprep.subr.mxu0 0.0
    %122 = vmatpush1.msra.mxu0 0.0
    %123 = vmatprep.subr.mxu0 0.0
    %124 = vmatpush1.msra.mxu0 0.0
    %125 = vmatprep.subr.mxu0 0.0
    %126 = vmatpush1.msra.mxu0 0.0
    %127 = vmatprep.subr.mxu0 0.0
    %128 = vmatpush1.msra.mxu0 0.0
    %129 = vmatprep.subr.mxu0 0.0
    %130 = vmatpush1.msra.mxu0 0.0
    %131 = vmatprep.subr.mxu0 0.0
    %132 = vmatpush1.msra.mxu0 0.0
    %133 = vmatprep.subr.mxu0 0.0
    %134 = vmatpush1.msra.mxu0 0.0
    %135 = vmatprep.subr.mxu0 0.0
    %136 = vmatpush1.msra.mxu0 0.0
    %137 = vmatprep.mubr.f32.mxu0 0.0
    %138 = vmatmul.mubr.f32.gmra.mrb[0].mxu0 %v49
    %v139 = vpop.f32.mrb[0].mxu0
    %v140 = vadd.f32 %v71, %v139
    %v141 = vpop.f32.mrb[0].mxu0
    %142 = vdwg.mxu0
    %v143 = vxor.u32 %v140, 2147483648
    %v144 = vmul.f32 %v143, 1.442695
    %v145 = vpow.pop %v144
    %v146 = vadd.f32 %v145, 1.0
    %v147 = vrcp.pop %v146
    %v148 = vmul.f32 1.0, %v147
    %v149 = vld [vmem:[#allocation5] sm:$0xff]
    %v150 = vld [vmem:[#allocation5 + $0x8] sm:$0xff]
    %v151 = vld [vmem:[#allocation5 + $0x10] sm:$0xff]
    %v152 = vld [vmem:[#allocation5 + $0x18] sm:$0xff]
    %v153 = vld [vmem:[#allocation5 + $0x20] sm:$0xff]
    %v154 = vld [vmem:[#allocation5 + $0x28] sm:$0xff]
    %v155 = vld [vmem:[#allocation5 + $0x30] sm:$0xff]
    %v156 = vld [vmem:[#allocation5 + $0x38] sm:$0xff]
    %v157 = vld [vmem:[#allocation5 + $0x40] sm:$0xff]
    %v158 = vld [vmem:[#allocation5 + $0x48] sm:$0xff]
    %v159 = vld [vmem:[#allocation5 + $0x50] sm:$0xff]
    %v160 = vld [vmem:[#allocation5 + $0x58] sm:$0xff]
    %v161 = vld [vmem:[#allocation5 + $0x60] sm:$0xff]
    %v162 = vld [vmem:[#allocation5 + $0x68] sm:$0xff]
    %v163 = vld [vmem:[#allocation5 + $0x70] sm:$0xff]
    %v164 = vld [vmem:[#allocation5 + $0x78] sm:$0xff]
    %v165 = vld [vmem:[%s4] sm:$0x1]
    %v167 = vlaneseq
    %v168 = vshrl.u32 %v167, 7
    %v169 = vsub.s32 0, %v168
    %v170 = vrot.slane %v165, %v169
    %172 = vmatprep.subr.mxu0 0.0
    %173 = vmatpush1.msra.mxu0 %v149
    %174 = vmatprep.subr.mxu0 0.0
    %175 = vmatpush1.msra.mxu0 %v150
    %176 = vmatprep.subr.mxu0 0.0
    %177 = vmatpush1.msra.mxu0 %v151
    %178 = vmatprep.subr.mxu0 0.0
    %179 = vmatpush1.msra.mxu0 %v152
    %180 = vmatprep.subr.mxu0 0.0
    %181 = vmatpush1.msra.mxu0 %v153
    %182 = vmatprep.subr.mxu0 0.0
    %183 = vmatpush1.msra.mxu0 %v154
    %184 = vmatprep.subr.mxu0 0.0
    %185 = vmatpush1.msra.mxu0 %v155
    %186 = vmatprep.subr.mxu0 0.0
    %187 = vmatpush1.msra.mxu0 %v156
    %188 = vmatprep.subr.mxu0 0.0
    %189 = vmatpush1.msra.mxu0 %v157
    %190 = vmatprep.subr.mxu0 0.0
    %191 = vmatpush1.msra.mxu0 %v158
    %192 = vmatprep.subr.mxu0 0.0
    %193 = vmatpush1.msra.mxu0 %v159
    %194 = vmatprep.subr.mxu0 0.0
    %195 = vmatpush1.msra.mxu0 %v160
    %196 = vmatprep.subr.mxu0 0.0
    %197 = vmatpush1.msra.mxu0 %v161
    %198 = vmatprep.subr.mxu0 0.0
    %199 = vmatpush1.msra.mxu0 %v162
    %200 = vmatprep.subr.mxu0 0.0
    %201 = vmatpush1.msra.mxu0 %v163
    %202 = vmatprep.subr.mxu0 0.0
    %203 = vmatpush1.msra.mxu0 %v164
    %204 = vmatprep.subr.mxu0 0.0
    %205 = vmatpush1.msra.mxu0 0.0
    %206 = vmatprep.subr.mxu0 0.0
    %207 = vmatpush1.msra.mxu0 0.0
    %208 = vmatprep.subr.mxu0 0.0
    %209 = vmatpush1.msra.mxu0 0.0
    %210 = vmatprep.subr.mxu0 0.0
    %211 = vmatpush1.msra.mxu0 0.0
    %212 = vmatprep.subr.mxu0 0.0
    %213 = vmatpush1.msra.mxu0 0.0
    %214 = vmatprep.subr.mxu0 0.0
    %215 = vmatpush1.msra.mxu0 0.0
    %216 = vmatprep.subr.mxu0 0.0
    %217 = vmatpush1.msra.mxu0 0.0
    %218 = vmatprep.subr.mxu0 0.0
    %219 = vmatpush1.msra.mxu0 0.0
    %220 = vmatprep.subr.mxu0 0.0
    %221 = vmatpush1.msra.mxu0 0.0
    %222 = vmatprep.subr.mxu0 0.0
    %223 = vmatpush1.msra.mxu0 0.0
    %224 = vmatprep.subr.mxu0 0.0
    %225 = vmatpush1.msra.mxu0 0.0
    %226 = vmatprep.subr.mxu0 0.0
    %227 = vmatpush1.msra.mxu0 0.0
    %228 = vmatprep.subr.mxu0 0.0
    %229 = vmatpush1.msra.mxu0 0.0
    %230 = vmatprep.subr.mxu0 0.0
    %231 = vmatpush1.msra.mxu0 0.0
    %232 = vmatprep.subr.mxu0 0.0
    %233 = vmatpush1.msra.mxu0 0.0
    %234 = vmatprep.subr.mxu0 0.0
    %235 = vmatpush1.msra.mxu0 0.0
    %236 = vmatprep.mubr.f32.mxu0 0.0
    %237 = vmatmul.mubr.f32.gmra.mrb[0].mxu0 %v148
    %v238 = vpop.f32.mrb[0].mxu0
    %v239 = vadd.f32 %v170, %v238
    %v240 = vpop.f32.mrb[0].mxu0
    %241 = vdwg.mxu0
    %v242 = vxor.u32 %v239, 2147483648
    %v243 = vmul.f32 %v242, 1.442695
    %v244 = vpow.pop %v243
    %v245 = vadd.f32 %v244, 1.0
    %v246 = vrcp.pop %v245
    %v247 = vmul.f32 1.0, %v246
    %248 = vst [vmem:[#allocation7] sm:$0xff] %v247
    // Predicated region
    $region30: #{_forward_impl.1} parent=1 // pred_check
      _
    $region31: #{_forward_impl.1} parent=1 // pred_check_branch
      %250 = sbr.rel (0) target = $region33
    $region32: #{_forward_impl.1} parent=1 // pred_region
      %s252 = ssub.s32 128, 128
      %253 = vsyncadd [#allocation4], %s252
      %s255 = sshll.u32 [#allocation7], 4
      %s256 = int_to_ptr.vmem [resolvable:$true] %s255
      %258 = dma.vmem_to_hbm [thread:$0]  %s256, 128, %s5, [#allocation4]
    $region33: #{_forward_impl.1} parent=1 // pred_fallthru
      _
    // Predicated region
    $region34: #{_forward_impl.1} parent=1 // pred_check
      _
    $region35: #{_forward_impl.1} parent=1 // pred_check_branch
      %260 = sbr.rel (0) target = $region37
    $region36: #{_forward_impl.1} parent=1 // pred_region
      %261 = dma.done [#allocation4], 128
    $region37: #{_forward_impl.1} parent=1 // pred_fallthru
      _
    %262 = vsyncpa [#allocation3], 1
    %263 = vsyncpa [#allocation6], 1
    %264 = vsyncpa [#allocation4], 1

</llo_original>
